<compile_context>
chip_gen: v7x
topology: tpu7x:2x2x1
jax: 0.10.0
libtpu: 0.0.40
codegen_flags: <defaults>
</compile_context>

<pallas_src>
from functools import partial

import jax
import jax.numpy as jnp
from jax.experimental import pallas as pl
from jax.experimental.pallas import tpu as pltpu


_LANE = 128
_SUBLANE_MULT = 32                  # keeps blocks sublane-aligned for f32/bf16/int8
_MIN_PIPELINE_BYTES = 256 * 1024    # below this, a single block (pipelining can't help)
_MIB = 1024 * 1024


def _relu_kernel(x_ref, o_ref):
    o_ref[...] = jnp.maximum(x_ref[...], 0)


def _block_budget_bytes() -> int:
    """Per-generation input-block byte budget (trace-time hardware query)."""
    try:
        vmem = int(getattr(pltpu.get_tpu_info(), "vmem_capacity_bytes", 128 * _MIB))
    except Exception:  # conservative fallback if the query is unavailable
        vmem = 128 * _MIB
    if vmem <= 64 * _MIB:
        # v7x: 3.2 TB/s HBM -> larger blocks amortize the ~0.35 us per-step
        # overhead; 4 x 8 MiB double buffers still fit the 64 MiB per-TC VMEM.
        return 8 * _MIB
    # v5e / v6e: 128 MiB physical VMEM, ~0.8-1.4 TB/s HBM.
    return 4 * _MIB


def _pick_block_rows(rows: int, lanes: int, itemsize: int) -> int:
    total_bytes = rows * lanes * itemsize
    if total_bytes <= _MIN_PIPELINE_BYTES or rows <= 2 * _SUBLANE_MULT:
        return rows  # single block == full array (always a legal BlockSpec)
    # Dtype-scaled target so bf16/int8 blocks carry as many bytes as f32 ones.
    target = _block_budget_bytes() // (lanes * itemsize)
    # Guarantee >= 2 grid steps so adjacent steps' input/output DMAs overlap.
    target = min(target, (rows + 1) // 2)
    # Round down to a multiple of 32 rows (sublane tiling for 8/16/32-bit dtypes).
    return max(_SUBLANE_MULT, (target // _SUBLANE_MULT) * _SUBLANE_MULT)


def _relu_2d(x2d: jax.Array, *, alias_input: bool = False) -> jax.Array:
    rows, lanes = x2d.shape
    itemsize = jnp.dtype(x2d.dtype).itemsize
    block_rows = _pick_block_rows(rows, lanes, itemsize)
    block_bytes = block_rows * lanes * itemsize
    # 2 input + 2 output double buffers plus headroom, capped comfortably under
    # the smallest physical VMEM (64 MiB per TC on v7x).
    vmem_limit = min(48 * _MIB, max(32 * _MIB, 4 * block_bytes + 8 * _MIB))
    return pl.pallas_call(
        _relu_kernel,
        out_shape=jax.ShapeDtypeStruct((rows, lanes), x2d.dtype),
        grid=(pl.cdiv(rows, block_rows),),
        in_specs=[pl.BlockSpec((block_rows, lanes), lambda i: (i, 0))],
        out_specs=pl.BlockSpec((block_rows, lanes), lambda i: (i, 0)),
        compiler_params=pltpu.CompilerParams(
            dimension_semantics=("parallel",),
            vmem_limit_bytes=vmem_limit,
        ),
        cost_estimate=pl.CostEstimate(
            flops=rows * lanes,
            transcendentals=0,
            bytes_accessed=2 * rows * lanes * itemsize,
        ),
        input_output_aliases={0: 0} if alias_input else {},
    )(x2d)


def _relu(x: jax.Array, *, donate: bool = False) -> jax.Array:
    orig_shape = x.shape
    flat = x.reshape(-1)            # free bitcast for default row-major layouts
    n = flat.shape[0]
    if n == 0:
        return x
    rem = n % _LANE
    if rem == 0:
        # Lane-dense (rows, 128) view: unmasked vector stores, no padding.
        out = _relu_2d(flat.reshape(n // _LANE, _LANE), alias_input=donate)
        return out.reshape(orig_shape)
    if n < _LANE:
        return jnp.maximum(x, 0)    # tiny ragged tensor: not worth a kernel launch
    # Ragged element count: kernel on the 128-aligned prefix, plain jnp.maximum
    # on the <128-element tail.  Avoids the pad + slice HBM round trips.
    aligned = n - rem
    head = _relu_2d(flat[:aligned].reshape(aligned // _LANE, _LANE)).reshape(-1)
    tail = jnp.maximum(flat[aligned:], 0)
    return jnp.concatenate([head, tail]).reshape(orig_shape)


relu = jax.jit(partial(_relu, donate=False))
# In-place style variant for callers that can donate their input buffer: the
# pallas_call aliases its output block onto the input and jit donation lets XLA
# reuse the HBM buffer (no extra output allocation for multi-GiB activations).
relu_inplace = jax.jit(partial(_relu, donate=True), donate_argnums=(0,))


class ReLU:
    """JAX/Pallas port of the PyTorch ReLU module (forward only)."""

    def __init__(self, fast: bool = False):
        # `fast` toggles F.relu vs torch.clamp_min in the reference; both are
        # the same elementwise max(x, 0), so a single kernel covers both.
        self.fast = fast

    def __call__(self, x: jax.Array) -> jax.Array:
        return relu(x)


if __name__ == "__main__":
    key = jax.random.PRNGKey(0)
    # NCHW-style input, small shapes.
    x = jax.random.normal(key, (2, 4, 16, 16), dtype=jnp.float32)

    mod = ReLU(fast=False)
    y = jax.block_until_ready(mod(x))

    ref = jnp.maximum(x, 0.0)
    assert y.shape == x.shape and y.dtype == x.dtype
    assert jnp.allclose(y, ref)

    # fast=True path is the same math.
    y_fast = jax.block_until_ready(ReLU(fast=True)(x))
    assert jnp.allclose(y_fast, ref)

    # Ragged shapes: element count < 128 (pure jnp path) and > 128 (prefix+tail).
    x2 = jax.random.normal(jax.random.PRNGKey(0), (3, 5, 7), dtype=jnp.float32)
    assert jnp.allclose(jax.block_until_ready(relu(x2)), jnp.maximum(x2, 0.0))
    x3 = jax.random.normal(jax.random.PRNGKey(0), (5, 67), dtype=jnp.float32)
    assert jnp.allclose(jax.block_until_ready(relu(x3)), jnp.maximum(x3, 0.0))

    # bf16 input exercising the dtype-scaled block sizing and multi-block pipeline.
    x4 = jax.random.normal(jax.random.PRNGKey(1), (2048, 256), dtype=jnp.bfloat16)
    y4 = jax.block_until_ready(relu(x4))
    assert y4.shape == x4.shape and y4.dtype == jnp.bfloat16
    assert jnp.array_equal(y4, jnp.maximum(x4, 0))

    print("KERNEL_OK")
</pallas_src>

<mosaic_0001>
module attributes {stable_mosaic.version = 11 : i64} {
  func.func @_relu_kernel(%arg0: i32, %arg1: memref<16x128xf32, #tpu.memory_space<vmem>>, %arg2: memref<16x128xf32, #tpu.memory_space<vmem>>) attributes {dimension_semantics = [#tpu.dimension_semantics<parallel>], iteration_bounds = array<i64: 1>, scalar_prefetch = 0 : i64, scratch_operands = 0 : i64, tpu.core_type = #tpu.core_type<tc>, window_params = [{transform_indices = @transform_0, window_bounds = array<i64: 16, 128>}, {transform_indices = @transform_1, window_bounds = array<i64: 16, 128>}]} {
    %c0 = arith.constant 0 : index
    %c0_0 = arith.constant 0 : index
    %0 = vector.load %arg1[%c0, %c0_0] : memref<16x128xf32, #tpu.memory_space<vmem>>, vector<16x128xf32>
    %cst = arith.constant 0.000000e+00 : f32
    %1 = vector.broadcast %cst : f32 to vector<16x128xf32>
    %2 = arith.maximumf %0, %1 : vector<16x128xf32>
    %c0_1 = arith.constant 0 : index
    %c0_2 = arith.constant 0 : index
    %3 = vector.load %arg2[%c0_1, %c0_2] : memref<16x128xf32, #tpu.memory_space<vmem>>, vector<16x128xf32>
    tpu.vector_store %arg2[%c0_1, %c0_2], %2 {strides = array<i32>} : memref<16x128xf32, #tpu.memory_space<vmem>>, vector<16x128xf32>,
    return
  }
  func.func @transform_0(%arg0: i32) -> (i32, i32) {
    %c0_i32 = arith.constant 0 : i32
    %c0_i32_0 = arith.constant 0 : i32
    return %arg0, %c0_i32 : i32, i32
  }
  func.func @transform_1(%arg0: i32) -> (i32, i32) {
    %c0_i32 = arith.constant 0 : i32
    %c0_i32_0 = arith.constant 0 : i32
    return %arg0, %c0_i32 : i32, i32
  }
}

</mosaic_0001>

<llo_original>
// kernel: _relu.1
$region0: #{_relu.1}
  #allocation0 [shape = 'u32[]', space=smem, size = 0x4, offset = 0x4, fixed_abs, tag = 'smem constant byte address 0x4 - core index']
  #allocation1 [shape = 'u32[144,128]{1,0:T(1,128)}', space=vmem, size = 0x12000, scoped, tag = 'internal scratch']
  %s0 = inlined_call_operand.vmem [shape: f32[16,128], index: 0, kind: input, shape index: {}]
  %s1 = inlined_call_operand.vmem [shape: f32[16,128], index: 1, kind: output, shape index: {}]
  %s2 = sld [smem:[#allocation0]]
  $region14: #{_relu.1} parent=0
    _
  %s4 = ssub.s32 1, %s2
  %s5 = scalar_select 0, %s4, %s2
  // Predicated region
  $region2: #{_relu.1} parent=0 // pred_check
    _
  $region3: #{_relu.1} parent=0 // pred_check_branch
    %7 = sbr.rel (0) target = $region5
  $region4: #{_relu.1} parent=0 // pred_region
    _
  $region5: #{_relu.1} parent=0 // pred_fallthru
    _
  %v8 = vld [vmem:[%s0] sm:$0xff]
  %v9 = vld [vmem:[%s0 + $0x8] sm:$0xff]
  %v10 = vmax.f32 %v8, 0.0
  %v11 = vmax.f32 %v9, 0.0
  %12 = vst [vmem:[%s1] sm:$0xff] %v10
  %13 = vst [vmem:[%s1 + $0x8] sm:$0xff] %v11
  // Predicated region
  $region6: #{_relu.1} parent=0 // pred_check
    _
  $region7: #{_relu.1} parent=0 // pred_check_branch
    %15 = sbr.rel (0) target = $region9
  $region8: #{_relu.1} parent=0 // pred_region
    _
  $region9: #{_relu.1} parent=0 // pred_fallthru
    _
  // Predicated region
  $region10: #{_relu.1} parent=0 // pred_check
    _
  $region11: #{_relu.1} parent=0 // pred_check_branch
    %17 = sbr.rel (0) target = $region13
  $region12: #{_relu.1} parent=0 // pred_region
    _
  $region13: #{_relu.1} parent=0 // pred_fallthru
    _

</llo_original>
